<compile_context>
chip_gen: v7x
topology: tpu7x:2x2x1
jax: 0.10.0
libtpu: 0.0.40
codegen_flags: <defaults>
</compile_context>

<pallas_src>
import jax
import jax.numpy as jnp
from jax.experimental import pallas as pl
from jax.experimental.pallas import tpu as pltpu

LANE = 128     # TPU lane width: pad feature dims to this (lane-dense stores)
SUBLANE = 8


def _round_up(x, m):
    return ((x + m - 1) // m) * m


def _fused_gcn_kernel(x_ref, a_ref, w1_ref, b1_ref, w2_ref, b2_ref,
                      o_ref, proj_ref, h_ref):
    """Two-stage fused GCN over a (stage, row_tile) grid.

    stage 0:  proj = X @ W1 (once, tile 0);   h[tile]  = relu(A[tile] @ proj + b1)
    stage 1:  proj = h @ W2 (once, tile 0);   out[tile] =      A[tile] @ proj + b2
    """
    s = pl.program_id(0)          # stage (0 = layer 1, 1 = layer 2)
    i = pl.program_id(1)          # row-tile index
    tm = a_ref.shape[0]
    row0 = pl.multiple_of(i * tm, tm)

    # ---- stage 0: first projection, computed once ------------------------
    @pl.when((s == 0) & (i == 0))
    def _():
        proj_ref[...] = jnp.dot(x_ref[...], w1_ref[...],
                                preferred_element_type=jnp.float32)

    # ---- stage 0: aggregate + bias + relu for this row tile ---------------
    @pl.when(s == 0)
    def _():
        h = jnp.dot(a_ref[...], proj_ref[...],
                    preferred_element_type=jnp.float32) + b1_ref[...]
        h_ref[pl.ds(row0, tm), :] = jnp.maximum(h, 0.0)

    # ---- stage 1: second projection, computed once (reuses proj scratch) --
    @pl.when((s == 1) & (i == 0))
    def _():
        proj_ref[...] = jnp.dot(h_ref[...], w2_ref[...],
                                preferred_element_type=jnp.float32)

    # ---- stage 1: aggregate + bias for this row tile -> output ------------
    @pl.when(s == 1)
    def _():
        o_ref[...] = (jnp.dot(a_ref[...], proj_ref[...],
                              preferred_element_type=jnp.float32)
                      + b2_ref[...]).astype(o_ref.dtype)


def gcn_forward(x, A, params, *, tm=None):
    """Fused GCN forward: relu?(A @ X @ W1 + b1) -> A @ h @ W2 + b2."""
    N, in_f = x.shape
    hid = params["W1"].shape[1]
    out_f = params["W2"].shape[1]

    # Common lane-dense feature width (zero-padded; math unchanged).
    FP = _round_up(max(in_f, hid, out_f), LANE)

    # Row tile: biggest reasonable tile for tiny graphs, 256 rows for big ones
    # (keeps 2 double-buffered A tiles + resident X/W/proj/h well under the
    #  32 MiB default scoped VMEM, incl. v7x's 64 MiB physical budget).
    if tm is None:
        tm = 256 if N >= 256 else _round_up(N, SUBLANE)
    Np = _round_up(N, tm)
    T = Np // tm

    # Zero-pad to TPU-friendly shapes (padding rows/cols contribute nothing).
    xp = jnp.pad(x, ((0, Np - N), (0, FP - in_f)))
    Ap = jnp.pad(A, ((0, Np - N), (0, Np - N)))
    w1 = jnp.pad(params["W1"], ((0, FP - in_f), (0, FP - hid)))
    w2 = jnp.pad(params["W2"], ((0, FP - hid), (0, FP - out_f)))
    b1 = jnp.pad(params["b1"], (0, FP - hid)).reshape(1, FP)
    b2 = jnp.pad(params["b2"], (0, FP - out_f)).reshape(1, FP)

    out = pl.pallas_call(
        _fused_gcn_kernel,
        out_shape=jax.ShapeDtypeStruct((Np, FP), jnp.float32),
        grid=(2, T),
        in_specs=[
            pl.BlockSpec((Np, FP), lambda s, i: (0, 0)),   # X   (resident)
            pl.BlockSpec((tm, Np), lambda s, i: (i, 0)),   # A   (row-tiled, pipelined)
            pl.BlockSpec((FP, FP), lambda s, i: (0, 0)),   # W1  (resident)
            pl.BlockSpec((1, FP), lambda s, i: (0, 0)),    # b1
            pl.BlockSpec((FP, FP), lambda s, i: (0, 0)),   # W2  (resident)
            pl.BlockSpec((1, FP), lambda s, i: (0, 0)),    # b2
        ],
        # Output tiles are only written in stage 1; mapping stage 0 onto block
        # (0,0) (never stored to there) avoids any garbage HBM writebacks.
        out_specs=pl.BlockSpec((tm, FP), lambda s, i: (s * i, 0)),
        scratch_shapes=[
            pltpu.VMEM((Np, FP), jnp.float32),   # proj: X@W1 (stage 0) then h@W2 (stage 1)
            pltpu.VMEM((Np, FP), jnp.float32),   # h = relu(A @ X@W1 + b1)
        ],
        # Stage axis is inherently sequential; the row axis carries a
        # cross-stage dependency through the h scratch, so keep it arbitrary.
        compiler_params=pltpu.CompilerParams(
            dimension_semantics=("arbitrary", "arbitrary"),
        ),
    )(xp, Ap, w1, b1, w2, b2)

    return out[:N, :out_f]


def init_params(key, in_f, hid, out_f):
    k1, k2 = jax.random.split(key)
    scale1 = 1.0 / jnp.sqrt(in_f)
    scale2 = 1.0 / jnp.sqrt(hid)
    return {
        "W1": jax.random.normal(k1, (in_f, hid), jnp.float32) * scale1,
        "b1": jnp.zeros((hid,), jnp.float32),
        "W2": jax.random.normal(k2, (hid, out_f), jnp.float32) * scale2,
        "b2": jnp.zeros((out_f,), jnp.float32),
    }


if __name__ == "__main__":
    key = jax.random.PRNGKey(0)
    kx, ka, kp = jax.random.split(key, 3)

    N, in_f, hid, out_f = 64, 32, 32, 16

    # Node features
    x = jax.random.normal(kx, (N, in_f), jnp.float32)

    # Symmetric, self-looped, row-normalized adjacency (standard GCN preprocessing)
    raw = (jax.random.uniform(ka, (N, N)) > 0.8).astype(jnp.float32)
    adj = jnp.clip(raw + raw.T + jnp.eye(N, dtype=jnp.float32), 0.0, 1.0)
    deg = jnp.sum(adj, axis=1, keepdims=True)
    A = adj / deg

    params = init_params(kp, in_f, hid, out_f)

    out = gcn_forward(x, A, params)
    jax.block_until_ready(out)

    # Pure-JAX reference check
    ref_h = jnp.maximum(A @ (x @ params["W1"]) + params["b1"], 0.0)
    ref = A @ (ref_h @ params["W2"]) + params["b2"]
    assert out.shape == ref.shape
    assert jnp.allclose(out, ref, atol=1e-4, rtol=1e-4), "mismatch vs reference"

    print("KERNEL_OK")
</pallas_src>

<mosaic_0001>
module attributes {stable_mosaic.version = 11 : i64} {
  func.func @_fused_gcn_kernel(%arg0: i32, %arg1: i32, %arg2: memref<64x128xf32, #tpu.memory_space<vmem>>, %arg3: memref<64x64xf32, #tpu.memory_space<vmem>>, %arg4: memref<128x128xf32, #tpu.memory_space<vmem>>, %arg5: memref<1x128xf32, #tpu.memory_space<vmem>>, %arg6: memref<128x128xf32, #tpu.memory_space<vmem>>, %arg7: memref<1x128xf32, #tpu.memory_space<vmem>>, %arg8: memref<64x128xf32, #tpu.memory_space<vmem>>, %arg9: memref<64x128xf32, #tpu.memory_space<vmem>>, %arg10: memref<64x128xf32, #tpu.memory_space<vmem>>) attributes {dimension_semantics = [#tpu.dimension_semantics<arbitrary>, #tpu.dimension_semantics<arbitrary>], iteration_bounds = array<i64: 2, 1>, scalar_prefetch = 0 : i64, scratch_operands = 2 : i64, tpu.core_type = #tpu.core_type<tc>, window_params = [{pipeline_mode = #tpu.pipeline_mode<synchronous>, transform_indices = @transform_0, window_bounds = array<i64: 64, 128>}, {transform_indices = @transform_1, window_bounds = array<i64: 64, 64>}, {pipeline_mode = #tpu.pipeline_mode<synchronous>, transform_indices = @transform_2, window_bounds = array<i64: 128, 128>}, {pipeline_mode = #tpu.pipeline_mode<synchronous>, transform_indices = @transform_3, window_bounds = array<i64: 1, 128>}, {pipeline_mode = #tpu.pipeline_mode<synchronous>, transform_indices = @transform_4, window_bounds = array<i64: 128, 128>}, {pipeline_mode = #tpu.pipeline_mode<synchronous>, transform_indices = @transform_5, window_bounds = array<i64: 1, 128>}, {transform_indices = @transform_6, window_bounds = array<i64: 64, 128>}]} {
    %c64_i32 = arith.constant 64 : i32
    %0 = arith.muli %arg1, %c64_i32 : i32
    %1 = tpu.assume_multiple %0, 64 : i32
    %c0_i32 = arith.constant 0 : i32
    %2 = arith.cmpi eq, %arg0, %c0_i32 : i32
    %c0_i32_0 = arith.constant 0 : i32
    %3 = arith.cmpi eq, %arg1, %c0_i32_0 : i32
    %4 = arith.andi %2, %3 : i1
    %5 = arith.extui %4 : i1 to i32
    %c0_i32_1 = arith.constant 0 : i32
    %6 = arith.cmpi ne, %5, %c0_i32_1 : i32
    scf.if %6 {
      %c0 = arith.constant 0 : index
      %c0_8 = arith.constant 0 : index
      %18 = vector.load %arg2[%c0, %c0_8] : memref<64x128xf32, #tpu.memory_space<vmem>>, vector<64x128xf32>
      %c0_9 = arith.constant 0 : index
      %c0_10 = arith.constant 0 : index
      %19 = vector.load %arg4[%c0_9, %c0_10] : memref<128x128xf32, #tpu.memory_space<vmem>>, vector<128x128xf32>
      %cst = arith.constant dense<0.000000e+00> : vector<64x128xf32>
      %20 = tpu.matmul %18, %19, %cst {dimension_numbers = #tpu.dot_dimension_numbers<[1], [0], [0], [1], [0, 0, 1, 1], [], []>} : vector<64x128xf32>, vector<128x128xf32>, vector<64x128xf32> -> vector<64x128xf32>
      %c0_11 = arith.constant 0 : index
      %c0_12 = arith.constant 0 : index
      %21 = vector.load %arg9[%c0_11, %c0_12] : memref<64x128xf32, #tpu.memory_space<vmem>>, vector<64x128xf32>
      tpu.vector_store %arg9[%c0_11, %c0_12], %20 {strides = array<i32>} : memref<64x128xf32, #tpu.memory_space<vmem>>, vector<64x128xf32>,
    } else {
    }
    %c0_i32_2 = arith.constant 0 : i32
    %7 = arith.cmpi eq, %arg0, %c0_i32_2 : i32
    %8 = arith.extui %7 : i1 to i32
    %c0_i32_3 = arith.constant 0 : i32
    %9 = arith.cmpi ne, %8, %c0_i32_3 : i32
    scf.if %9 {
      %c0 = arith.constant 0 : index
      %c0_8 = arith.constant 0 : index
      %18 = vector.load %arg3[%c0, %c0_8] : memref<64x64xf32, #tpu.memory_space<vmem>>, vector<64x64xf32>
      %c0_9 = arith.constant 0 : index
      %c0_10 = arith.constant 0 : index
      %19 = vector.load %arg9[%c0_9, %c0_10] : memref<64x128xf32, #tpu.memory_space<vmem>>, vector<64x128xf32>
      %cst = arith.constant dense<0.000000e+00> : vector<64x128xf32>
      %20 = tpu.matmul %18, %19, %cst {dimension_numbers = #tpu.dot_dimension_numbers<[1], [0], [0], [1], [0, 0, 1, 1], [], []>} : vector<64x64xf32>, vector<64x128xf32>, vector<64x128xf32> -> vector<64x128xf32>
      %c0_11 = arith.constant 0 : index
      %c0_12 = arith.constant 0 : index
      %21 = vector.load %arg5[%c0_11, %c0_12] : memref<1x128xf32, #tpu.memory_space<vmem>>, vector<1x128xf32>
      %22 = vector.broadcast %21 : vector<1x128xf32> to vector<64x128xf32>
      %23 = arith.addf %20, %22 : vector<64x128xf32>
      %cst_13 = arith.constant 0.000000e+00 : f32
      %24 = vector.broadcast %cst_13 : f32 to vector<64x128xf32>
      %25 = arith.maximumf %23, %24 : vector<64x128xf32>
      %26 = arith.index_cast %1 : i32 to index
      %c0_14 = arith.constant 0 : index
      %27 = vector.load %arg10[%26, %c0_14] : memref<64x128xf32, #tpu.memory_space<vmem>>, vector<64x128xf32>
      tpu.vector_store %arg10[%26, %c0_14], %25 {strides = array<i32>} : memref<64x128xf32, #tpu.memory_space<vmem>>, vector<64x128xf32>,
    } else {
    }
    %c1_i32 = arith.constant 1 : i32
    %10 = arith.cmpi eq, %arg0, %c1_i32 : i32
    %c0_i32_4 = arith.constant 0 : i32
    %11 = arith.cmpi eq, %arg1, %c0_i32_4 : i32
    %12 = arith.andi %10, %11 : i1
    %13 = arith.extui %12 : i1 to i32
    %c0_i32_5 = arith.constant 0 : i32
    %14 = arith.cmpi ne, %13, %c0_i32_5 : i32
    scf.if %14 {
      %c0 = arith.constant 0 : index
      %c0_8 = arith.constant 0 : index
      %18 = vector.load %arg10[%c0, %c0_8] : memref<64x128xf32, #tpu.memory_space<vmem>>, vector<64x128xf32>
      %c0_9 = arith.constant 0 : index
      %c0_10 = arith.constant 0 : index
      %19 = vector.load %arg6[%c0_9, %c0_10] : memref<128x128xf32, #tpu.memory_space<vmem>>, vector<128x128xf32>
      %cst = arith.constant dense<0.000000e+00> : vector<64x128xf32>
      %20 = tpu.matmul %18, %19, %cst {dimension_numbers = #tpu.dot_dimension_numbers<[1], [0], [0], [1], [0, 0, 1, 1], [], []>} : vector<64x128xf32>, vector<128x128xf32>, vector<64x128xf32> -> vector<64x128xf32>
      %c0_11 = arith.constant 0 : index
      %c0_12 = arith.constant 0 : index
      %21 = vector.load %arg9[%c0_11, %c0_12] : memref<64x128xf32, #tpu.memory_space<vmem>>, vector<64x128xf32>
      tpu.vector_store %arg9[%c0_11, %c0_12], %20 {strides = array<i32>} : memref<64x128xf32, #tpu.memory_space<vmem>>, vector<64x128xf32>,
    } else {
    }
    %c1_i32_6 = arith.constant 1 : i32
    %15 = arith.cmpi eq, %arg0, %c1_i32_6 : i32
    %16 = arith.extui %15 : i1 to i32
    %c0_i32_7 = arith.constant 0 : i32
    %17 = arith.cmpi ne, %16, %c0_i32_7 : i32
    scf.if %17 {
      %c0 = arith.constant 0 : index
      %c0_8 = arith.constant 0 : index
      %18 = vector.load %arg3[%c0, %c0_8] : memref<64x64xf32, #tpu.memory_space<vmem>>, vector<64x64xf32>
      %c0_9 = arith.constant 0 : index
      %c0_10 = arith.constant 0 : index
      %19 = vector.load %arg9[%c0_9, %c0_10] : memref<64x128xf32, #tpu.memory_space<vmem>>, vector<64x128xf32>
      %cst = arith.constant dense<0.000000e+00> : vector<64x128xf32>
      %20 = tpu.matmul %18, %19, %cst {dimension_numbers = #tpu.dot_dimension_numbers<[1], [0], [0], [1], [0, 0, 1, 1], [], []>} : vector<64x64xf32>, vector<64x128xf32>, vector<64x128xf32> -> vector<64x128xf32>
      %c0_11 = arith.constant 0 : index
      %c0_12 = arith.constant 0 : index
      %21 = vector.load %arg7[%c0_11, %c0_12] : memref<1x128xf32, #tpu.memory_space<vmem>>, vector<1x128xf32>
      %22 = vector.broadcast %21 : vector<1x128xf32> to vector<64x128xf32>
      %23 = arith.addf %20, %22 : vector<64x128xf32>
      %c0_13 = arith.constant 0 : index
      %c0_14 = arith.constant 0 : index
      %24 = vector.load %arg8[%c0_13, %c0_14] : memref<64x128xf32, #tpu.memory_space<vmem>>, vector<64x128xf32>
      tpu.vector_store %arg8[%c0_13, %c0_14], %23 {strides = array<i32>} : memref<64x128xf32, #tpu.memory_space<vmem>>, vector<64x128xf32>,
    } else {
    }
    return
  }
  func.func @transform_0(%arg0: i32, %arg1: i32) -> (i32, i32) {
    %c0_i32 = arith.constant 0 : i32
    %c0_i32_0 = arith.constant 0 : i32
    %c0_i32_1 = arith.constant 0 : i32
    return %c0_i32, %c0_i32_0 : i32, i32
  }
  func.func @transform_1(%arg0: i32, %arg1: i32) -> (i32, i32) {
    %c0_i32 = arith.constant 0 : i32
    %c0_i32_0 = arith.constant 0 : i32
    return %arg1, %c0_i32 : i32, i32
  }
  func.func @transform_2(%arg0: i32, %arg1: i32) -> (i32, i32) {
    %c0_i32 = arith.constant 0 : i32
    %c0_i32_0 = arith.constant 0 : i32
    %c0_i32_1 = arith.constant 0 : i32
    return %c0_i32, %c0_i32_0 : i32, i32
  }
  func.func @transform_3(%arg0: i32, %arg1: i32) -> (i32, i32) {
    %c0_i32 = arith.constant 0 : i32
    %c0_i32_0 = arith.constant 0 : i32
    %c0_i32_1 = arith.constant 0 : i32
    return %c0_i32, %c0_i32_0 : i32, i32
  }
  func.func @transform_4(%arg0: i32, %arg1: i32) -> (i32, i32) {
    %c0_i32 = arith.constant 0 : i32
    %c0_i32_0 = arith.constant 0 : i32
    %c0_i32_1 = arith.constant 0 : i32
    return %c0_i32, %c0_i32_0 : i32, i32
  }
  func.func @transform_5(%arg0: i32, %arg1: i32) -> (i32, i32) {
    %c0_i32 = arith.constant 0 : i32
    %c0_i32_0 = arith.constant 0 : i32
    %c0_i32_1 = arith.constant 0 : i32
    return %c0_i32, %c0_i32_0 : i32, i32
  }
  func.func @transform_6(%arg0: i32, %arg1: i32) -> (i32, i32) {
    %0 = arith.muli %arg0, %arg1 : i32
    %c0_i32 = arith.constant 0 : i32
    %c0_i32_0 = arith.constant 0 : i32
    return %0, %c0_i32 : i32, i32
  }
}

</mosaic_0001>

<llo_original>
// kernel: tpu_custom_call.1
$region0: #{tpu_custom_call.1}
  #allocation0 [shape = 'u32[]', space=smem, size = 0x4, offset = 0x4, fixed_abs, tag = 'smem constant byte address 0x4 - core index']
  #allocation1 [shape = 'u32[144,128]{1,0:T(1,128)}', space=vmem, size = 0x12000, scoped, tag = 'internal scratch']
  #allocation2 [shape = 'f32[64,128]{1,0:T(8,128)}', space=vmem, size = 0x8000, scoped, tag = 'scratch operand']
  #allocation3 [shape = 'f32[64,128]{1,0:T(8,128)}', space=vmem, size = 0x8000, scoped, tag = 'scratch operand']
  %s0 = inlined_call_operand.hbm [shape: f32[64,128], index: 0, kind: input, shape index: {}]
  %s1 = inlined_call_operand.hbm [shape: f32[64,64], index: 1, kind: input, shape index: {}]
  %s2 = inlined_call_operand.hbm [shape: f32[128,128], index: 2, kind: input, shape index: {}]
  %s3 = inlined_call_operand.vmem [shape: f32[1,128], index: 3, kind: input, shape index: {}]
  %s4 = inlined_call_operand.hbm [shape: f32[128,128], index: 4, kind: input, shape index: {}]
  %s5 = inlined_call_operand.vmem [shape: f32[1,128], index: 5, kind: input, shape index: {}]
  %s6 = inlined_call_operand.hbm [shape: f32[64,128], index: 6, kind: output, shape index: {}]
  %s7 = sld [smem:[#allocation0]]
  $region89: #{tpu_custom_call.1} parent=0
    _
  %s9 = ssub.s32 1, %s7
  %s10 = scalar_select 0, %s9, %s7
  $region1: #{tpu_custom_call.1} parent=0
    #allocation4 [shape = 'u8[32768]{0}', space=vmem, size = 0x8000, scoped, tag = 'input window, operand 0, single buffered']
    #allocation5 [shape = 's32[2]{0}', space=sflag, size = 0x8, scoped, tag = 'scoped memory for tpu_custom_call.1']
    #allocation6 [shape = 's32[2]{0}', space=sflag, size = 0x8, scoped, tag = 'scoped memory for tpu_custom_call.1']
    #allocation7 [shape = 'u8[32768]{0}', space=vmem, size = 0x8000, scoped, tag = 'input window, operand 1, single buffered']
    #allocation8 [shape = 's32[1]{0}', space=sflag, size = 0x4, scoped, tag = 'scoped memory for tpu_custom_call.1']
    #allocation9 [shape = 'u8[65536]{0}', space=vmem, size = 0x10000, scoped, tag = 'input window, operand 2, single buffered']
    #allocation10 [shape = 'u8[65536]{0}', space=vmem, size = 0x10000, scoped, tag = 'input window, operand 4, single buffered']
    #allocation11 [shape = 's32[1]{0}', space=sflag, size = 0x4, scoped, tag = 'scoped memory for tpu_custom_call.1']
    #allocation12 [shape = 'u8[65536]{0}', space=vmem, size = 0x10000, scoped, tag = 'output window, operand 0']
    %11 = vsyncpa [#allocation5], 0
    %12 = vsyncpa [#allocation8], 0
    %13 = vsyncpa [#allocation11], 0
    %14 = vsyncpa [#allocation6], 0
    %s15 = scalar_lea.sflag [#allocation6], 1
    %16 = vsyncpa %s15, 0
    loop: start=0, step=1, limit=4
    $region2: #{tpu_custom_call.1} parent=1 // loop_pre_header
      _
    $region3: #{tpu_custom_call.1} parent=1 // loop_header
      %s18 = sphi 0, %s22
      %p19 = scmp.ge.s32.totalorder %s18, 4
      %s25 = sphi 0, %s37
      %s26 = sphi 0, %s33
      %s27 = sphi 0, %s25
      %s28 = sphi 0, %s26
      %s29 = sphi 0, %s27
      %s30 = sphi 0, %s28
      %s38 = sphi 0, %s38
      %s40 = sphi 0, %s38
      %s41 = sphi 0, %s40
      %s55 = sphi 0, %s41
      %s61 = sphi 0, %s63
      %s64 = sphi 0, %s61
      %s65 = sphi 0, %s64
      %s81 = sphi 0, %s65
      %s85 = sphi 0, %s85
      %s87 = sphi 0, %s85
      %s88 = sphi 0, %s87
      %s102 = sphi 0, %s88
      %s106 = sphi 0, %s106
      %s108 = sphi 0, %s106
      %s109 = sphi 0, %s108
      %s123 = sphi 0, %s109
      %s127 = sphi 0, %s127
      %s129 = sphi 0, %s127
      %s130 = sphi 0, %s129
      %s144 = sphi 0, %s130
      %s148 = sphi 0, %s148
      %s150 = sphi 0, %s148
      %s151 = sphi 0, %s150
      %s165 = sphi 0, %s151
      %s173 = sphi 0, %s175
      %s176 = sphi 0, %s173
      %s177 = sphi 0, %s176
      %s193 = sphi 0, %s177
    $region4: #{tpu_custom_call.1} parent=1 // loop_header_branch
      %21 = sbr.rel (%p19) target = $region8
    $region5: #{tpu_custom_call.1} parent=1 // loop_body
      %s23 = ssub.s32 %s18, 1
      %s24 = ssub.s32 %s18, 2
      %s31 = sadd.s32 1, %s26
      %p32 = scmp.ge.s32.totalorder %s31, 1
      %s33 = scalar_select %p32, 0, %s31
      %s34 = sadd.s32 1, %s25
      %s35 = scalar_select %p32, %s34, %s25
      %p36 = scmp.ge.s32.totalorder %s35, 2
      %s37 = scalar_select %p36, 0, %s35
      %s39 = sadd.s32 %s38, 1
      %p42 = scmp.eq.s32.totalorder %s18, 1
      %p43 = scmp.ne.s32.totalorder %s38, %s40
      %p44 = scmp.eq.s32.totalorder %s18, 0
      %p45 = por %p43, %p44
      %p46 = scmp.ne.s32.totalorder %s38, %s40
      %p47 = scmp.eq.s32.totalorder %s23, 1
      %p48 = por %p46, %p47
      %p49 = scmp.ne.s32.totalorder %s40, %s41
      %p50 = scmp.eq.s32.totalorder %s23, 0
      %p51 = por %p49, %p50
      %p52 = scmp.ne.s32.totalorder %s40, %s41
      %p53 = scmp.eq.s32.totalorder %s24, 1
      %p54 = por %p52, %p53
      %p56 = scmp.ne.s32.totalorder %s41, %s55
      %p57 = scmp.eq.s32.totalorder %s24, 0
      %p58 = por %p56, %p57
      %s59 = ssub.s32 %s26, %s33
      %p60 = scmp.eq.s32.totalorder %s59, 0
      %s62 = sadd.s32 %s61, 1
      %s63 = scalar_select %p60, %s61, %s62
      %p66 = pneg %p60
      %p67 = scmp.eq.s32.totalorder %s18, 1
      %p68 = por %p66, %p67
      %p69 = scmp.ne.s32.totalorder %s61, %s64
      %p70 = scmp.eq.s32.totalorder %s18, 0
      %p71 = por %p69, %p70
      %p72 = scmp.ne.s32.totalorder %s61, %s64
      %p73 = scmp.eq.s32.totalorder %s23, 1
      %p74 = por %p72, %p73
      %p75 = scmp.ne.s32.totalorder %s64, %s65
      %p76 = scmp.eq.s32.totalorder %s23, 0
      %p77 = por %p75, %p76
      %p78 = scmp.ne.s32.totalorder %s64, %s65
      %p79 = scmp.eq.s32.totalorder %s24, 1
      %p80 = por %p78, %p79
      %p82 = scmp.ne.s32.totalorder %s65, %s81
      %p83 = scmp.eq.s32.totalorder %s24, 0
      %p84 = por %p82, %p83
      %s86 = sadd.s32 %s85, 1
      %p89 = scmp.eq.s32.totalorder %s18, 1
      %p90 = scmp.ne.s32.totalorder %s85, %s87
      %p91 = scmp.eq.s32.totalorder %s18, 0
      %p92 = por %p90, %p91
      %p93 = scmp.ne.s32.totalorder %s85, %s87
      %p94 = scmp.eq.s32.totalorder %s23, 1
      %p95 = por %p93, %p94
      %p96 = scmp.ne.s32.totalorder %s87, %s88
      %p97 = scmp.eq.s32.totalorder %s23, 0
      %p98 = por %p96, %p97
      %p99 = scmp.ne.s32.totalorder %s87, %s88
      %p100 = scmp.eq.s32.totalorder %s24, 1
      %p101 = por %p99, %p100
      %p103 = scmp.ne.s32.totalorder %s88, %s102
      %p104 = scmp.eq.s32.totalorder %s24, 0
      %p105 = por %p103, %p104
      %s107 = sadd.s32 %s106, 1
      %p110 = scmp.eq.s32.totalorder %s18, 1
      %p111 = scmp.ne.s32.totalorder %s106, %s108
      %p112 = scmp.eq.s32.totalorder %s18, 0
      %p113 = por %p111, %p112
      %p114 = scmp.ne.s32.totalorder %s106, %s108
      %p115 = scmp.eq.s32.totalorder %s23, 1
      %p116 = por %p114, %p115
      %p117 = scmp.ne.s32.totalorder %s108, %s109
      %p118 = scmp.eq.s32.totalorder %s23, 0
      %p119 = por %p117, %p118
      %p120 = scmp.ne.s32.totalorder %s108, %s109
      %p121 = scmp.eq.s32.totalorder %s24, 1
      %p122 = por %p120, %p121
      %p124 = scmp.ne.s32.totalorder %s109, %s123
      %p125 = scmp.eq.s32.totalorder %s24, 0
      %p126 = por %p124, %p125
      %s128 = sadd.s32 %s127, 1
      %p131 = scmp.eq.s32.totalorder %s18, 1
      %p132 = scmp.ne.s32.totalorder %s127, %s129
      %p133 = scmp.eq.s32.totalorder %s18, 0
      %p134 = por %p132, %p133
      %p135 = scmp.ne.s32.totalorder %s127, %s129
      %p136 = scmp.eq.s32.totalorder %s23, 1
      %p137 = por %p135, %p136
      %p138 = scmp.ne.s32.totalorder %s129, %s130
      %p139 = scmp.eq.s32.totalorder %s23, 0
      %p140 = por %p138, %p139
      %p141 = scmp.ne.s32.totalorder %s129, %s130
      %p142 = scmp.eq.s32.totalorder %s24, 1
      %p143 = por %p141, %p142
      %p145 = scmp.ne.s32.totalorder %s130, %s144
      %p146 = scmp.eq.s32.totalorder %s24, 0
      %p147 = por %p145, %p146
      %s149 = sadd.s32 %s148, 1
      %p152 = scmp.eq.s32.totalorder %s18, 1
      %p153 = scmp.ne.s32.totalorder %s148, %s150
      %p154 = scmp.eq.s32.totalorder %s18, 0
      %p155 = por %p153, %p154
      %p156 = scmp.ne.s32.totalorder %s148, %s150
      %p157 = scmp.eq.s32.totalorder %s23, 1
      %p158 = por %p156, %p157
      %p159 = scmp.ne.s32.totalorder %s150, %s151
      %p160 = scmp.eq.s32.totalorder %s23, 0
      %p161 = por %p159, %p160
      %p162 = scmp.ne.s32.totalorder %s150, %s151
      %p163 = scmp.eq.s32.totalorder %s24, 1
      %p164 = por %p162, %p163
      %p166 = scmp.ne.s32.totalorder %s151, %s165
      %p167 = scmp.eq.s32.totalorder %s24, 0
      %p168 = por %p166, %p167
      %s169 = smul.u32 %s25, %s26
      %s170 = smul.u32 %s37, %s33
      %s171 = ssub.s32 %s169, %s170
      %p172 = scmp.eq.s32.totalorder %s171, 0
      %s174 = sadd.s32 %s173, 1
      %s175 = scalar_select %p172, %s173, %s174
      %p178 = pneg %p172
      %p179 = scmp.eq.s32.totalorder %s18, 1
      %p180 = por %p178, %p179
      %p181 = scmp.ne.s32.totalorder %s173, %s176
      %p182 = scmp.eq.s32.totalorder %s18, 0
      %p183 = por %p181, %p182
      %p184 = scmp.ne.s32.totalorder %s173, %s176
      %p185 = scmp.eq.s32.totalorder %s23, 1
      %p186 = por %p184, %p185
      %p187 = scmp.ne.s32.totalorder %s176, %s177
      %p188 = scmp.eq.s32.totalorder %s23, 0
      %p189 = por %p187, %p188
      %p190 = scmp.ne.s32.totalorder %s176, %s177
      %p191 = scmp.eq.s32.totalorder %s24, 1
      %p192 = por %p190, %p191
      %p194 = scmp.ne.s32.totalorder %s177, %s193
      %p195 = scmp.eq.s32.totalorder %s24, 0
      %p196 = por %p194, %p195
      %p197 = scmp.le.s32.totalorder 1, %s18
      %p198 = scmp.lt.s32.totalorder %s18, 3
      %p199 = pnand %p197, %p198
      %p200 = pneg %p199
      // Predicated region
      $region9: #{tpu_custom_call.1} parent=5 // pred_check
        _
      $region10: #{tpu_custom_call.1} parent=5 // pred_check_branch
        %202 = sbr.rel (%p199) target = $region12
      $region11: #{tpu_custom_call.1} parent=5 // pred_region
        %s203 = ssub.s32 %s18, 1
        // Predicated region
        $region13: #{tpu_custom_call.1} parent=11 // pred_check
          %p204 = pneg %p51
        $region14: #{tpu_custom_call.1} parent=11 // pred_check_branch
          %206 = sbr.rel (%p204) target = $region16
        $region15: #{tpu_custom_call.1} parent=11 // pred_region
          %s208 = ssub.s32 1024, 1024
          %209 = vsyncadd [#allocation5], %s208
          %s210 = sshll.u32 [#allocation4], 4
          %s211 = int_to_ptr.vmem [resolvable:$true] %s210
          %216 = dma.hbm_to_vmem [thread:$0]  %s0, 1024, %s211, [#allocation5], 128, 128, 8
        $region16: #{tpu_custom_call.1} parent=11 // pred_fallthru
          _
        // Predicated region
        $region17: #{tpu_custom_call.1} parent=11 // pred_check
          %p217 = pneg %p77
        $region18: #{tpu_custom_call.1} parent=11 // pred_check_branch
          %219 = sbr.rel (%p217) target = $region20
        $region19: #{tpu_custom_call.1} parent=11 // pred_region
          %s220 = smul.u32 8, %s28
          %s222 = ssub.s32 1024, 1024
          %223 = vsyncadd [#allocation8], %s222
          %s224 = smul.addr %s220, 128
          %s225 = scalar_lea.hbm %s1, %s224
          %s226 = sshll.u32 [#allocation7], 4
          %s227 = int_to_ptr.vmem [resolvable:$true] %s226
          %232 = dma.hbm_to_vmem [thread:$0]  %s225, 1024, %s227, [#allocation8], 128, 128, 8
        $region20: #{tpu_custom_call.1} parent=11 // pred_fallthru
          _
        // Predicated region
        $region21: #{tpu_custom_call.1} parent=11 // pred_check
          %p233 = pneg %p98
        $region22: #{tpu_custom_call.1} parent=11 // pred_check_branch
          %235 = sbr.rel (%p233) target = $region24
        $region23: #{tpu_custom_call.1} parent=11 // pred_region
          %s237 = ssub.s32 2048, 2048
          %238 = vsyncadd [#allocation8], %s237
          %s239 = sshll.u32 [#allocation9], 4
          %s240 = int_to_ptr.vmem [resolvable:$true] %s239
          %245 = dma.hbm_to_vmem [thread:$0]  %s2, 2048, %s240, [#allocation8], 128, 128, 8
        $region24: #{tpu_custom_call.1} parent=11 // pred_fallthru
          _
        // Predicated region
        $region25: #{tpu_custom_call.1} parent=11 // pred_check
          %p246 = pneg %p119
        $region26: #{tpu_custom_call.1} parent=11 // pred_check_branch
          %248 = sbr.rel (%p246) target = $region28
        $region27: #{tpu_custom_call.1} parent=11 // pred_region
          _
        $region28: #{tpu_custom_call.1} parent=11 // pred_fallthru
          _
        // Predicated region
        $region29: #{tpu_custom_call.1} parent=11 // pred_check
          %p249 = pneg %p140
        $region30: #{tpu_custom_call.1} parent=11 // pred_check_branch
          %251 = sbr.rel (%p249) target = $region32
        $region31: #{tpu_custom_call.1} parent=11 // pred_region
          %s253 = ssub.s32 2048, 2048
          %254 = vsyncadd [#allocation11], %s253
          %s255 = sshll.u32 [#allocation10], 4
          %s256 = int_to_ptr.vmem [resolvable:$true] %s255
          %261 = dma.hbm_to_vmem [thread:$0]  %s4, 2048, %s256, [#allocation11], 128, 128, 8
        $region32: #{tpu_custom_call.1} parent=11 // pred_fallthru
          _
        // Predicated region
        $region33: #{tpu_custom_call.1} parent=11 // pred_check
          %p262 = pneg %p161
        $region34: #{tpu_custom_call.1} parent=11 // pred_check_branch
          %264 = sbr.rel (%p262) target = $region36
        $region35: #{tpu_custom_call.1} parent=11 // pred_region
          _
        $region36: #{tpu_custom_call.1} parent=11 // pred_fallthru
          _
      $region12: #{tpu_custom_call.1} parent=5 // pred_fallthru
        _
      %p265 = scmp.lt.s32.totalorder %s18, 2
      // Predicated region
      $region37: #{tpu_custom_call.1} parent=5 // pred_check
        %p266 = pneg %p265
      $region38: #{tpu_custom_call.1} parent=5 // pred_check_branch
        %268 = sbr.rel (%p266) target = $region40
      $region39: #{tpu_custom_call.1} parent=5 // pred_region
        _
      $region40: #{tpu_custom_call.1} parent=5 // pred_fallthru
        _
      %p269 = scmp.le.s32.totalorder 1, %s18
      %p270 = scmp.lt.s32.totalorder %s18, 3
      %p271 = pnand %p269, %p270
      %p272 = pneg %p271
      // Predicated region
      $region41: #{tpu_custom_call.1} parent=5 // pred_check
        _
      $region42: #{tpu_custom_call.1} parent=5 // pred_check_branch
        %274 = sbr.rel (%p271) target = $region44
      $region43: #{tpu_custom_call.1} parent=5 // pred_region
        %s275 = ssub.s32 %s18, 1
        // Predicated region
        $region45: #{tpu_custom_call.1} parent=43 // pred_check
          %p276 = pneg %p51
        $region46: #{tpu_custom_call.1} parent=43 // pred_check_branch
          %278 = sbr.rel (%p276) target = $region48
        $region47: #{tpu_custom_call.1} parent=43 // pred_region
          %279 = dma.done [#allocation5], 1024
        $region48: #{tpu_custom_call.1} parent=43 // pred_fallthru
          _
        // Predicated region
        $region49: #{tpu_custom_call.1} parent=43 // pred_check
          %p280 = pneg %p77
        $region50: #{tpu_custom_call.1} parent=43 // pred_check_branch
          %282 = sbr.rel (%p280) target = $region52
        $region51: #{tpu_custom_call.1} parent=43 // pred_region
          %283 = dma.done [#allocation8], 1024
        $region52: #{tpu_custom_call.1} parent=43 // pred_fallthru
          _
        // Predicated region
        $region53: #{tpu_custom_call.1} parent=43 // pred_check
          %p284 = pneg %p98
        $region54: #{tpu_custom_call.1} parent=43 // pred_check_branch
          %286 = sbr.rel (%p284) target = $region56
        $region55: #{tpu_custom_call.1} parent=43 // pred_region
          %287 = dma.done [#allocation8], 2048
        $region56: #{tpu_custom_call.1} parent=43 // pred_fallthru
          _
        // Predicated region
        $region57: #{tpu_custom_call.1} parent=43 // pred_check
          %p288 = pneg %p140
        $region58: #{tpu_custom_call.1} parent=43 // pred_check_branch
          %290 = sbr.rel (%p288) target = $region60
        $region59: #{tpu_custom_call.1} parent=43 // pred_region
          %291 = dma.done [#allocation11], 2048
        $region60: #{tpu_custom_call.1} parent=43 // pred_fallthru
          _
        %p292 = pneg %p51
        %p293 = pneg %p48
        %p294 = pneg %p77
        %p295 = pneg %p74
        %p296 = pneg %p98
        %p297 = pneg %p95
        %p298 = pneg %p119
        %p299 = pneg %p116
        %p300 = pneg %p140
        %p301 = pneg %p137
        %p302 = pneg %p161
        %p303 = pneg %p158
        %p304 = pneg %p189
        %p305 = pneg %p186
        %s306 = sand.u32 %s176, 1
        %s307 = scalar_lea.sflag [#allocation6], %s306
        %s308 = sand.u32 %s176, 1
        %s309 = smul.addr %s308, 64
        %s310 = scalar_lea.vmem [#allocation12], %s309
        %s311 = smul.u32 8, %s28
        %s312 = smul.u32 %s27, %s28
        %s313 = smul.u32 8, %s312
        %s314 = smul.u32 %s28, 64
        %p315 = scmp.eq.s32.totalorder %s27, 0
        %p316 = scmp.eq.s32.totalorder %s28, 0
        %p317 = pnand %p315, %p316
        %p318 = pneg %p317
        // Predicated region
        $region61: #{tpu_custom_call.1} parent=43 // pred_check
          _
        $region62: #{tpu_custom_call.1} parent=43 // pred_check_branch
          %320 = sbr.rel (%p317) target = $region64
        $region63: #{tpu_custom_call.1} parent=43 // pred_region
          %v321 = vld [vmem:[#allocation4] sm:$0xff]
          %v322 = vld [vmem:[#allocation4 + $0x8] sm:$0xff]
          %v323 = vld [vmem:[#allocation4 + $0x10] sm:$0xff]
          %v324 = vld [vmem:[#allocation4 + $0x18] sm:$0xff]
          %v325 = vld [vmem:[#allocation4 + $0x20] sm:$0xff]
          %v326 = vld [vmem:[#allocation4 + $0x28] sm:$0xff]
          %v327 = vld [vmem:[#allocation4 + $0x30] sm:$0xff]
          %v328 = vld [vmem:[#allocation4 + $0x38] sm:$0xff]
          %v329 = vld [vmem:[#allocation9] sm:$0xff]
          %v330 = vld [vmem:[#allocation9 + $0x8] sm:$0xff]
          %v331 = vld [vmem:[#allocation9 + $0x10] sm:$0xff]
          %v332 = vld [vmem:[#allocation9 + $0x18] sm:$0xff]
          %v333 = vld [vmem:[#allocation9 + $0x20] sm:$0xff]
          %v334 = vld [vmem:[#allocation9 + $0x28] sm:$0xff]
          %v335 = vld [vmem:[#allocation9 + $0x30] sm:$0xff]
          %v336 = vld [vmem:[#allocation9 + $0x38] sm:$0xff]
          %v337 = vld [vmem:[#allocation9 + $0x40] sm:$0xff]
          %v338 = vld [vmem:[#allocation9 + $0x48] sm:$0xff]
          %v339 = vld [vmem:[#allocation9 + $0x50] sm:$0xff]
          %v340 = vld [vmem:[#allocation9 + $0x58] sm:$0xff]
          %v341 = vld [vmem:[#allocation9 + $0x60] sm:$0xff]
          %v342 = vld [vmem:[#allocation9 + $0x68] sm:$0xff]
          %v343 = vld [vmem:[#allocation9 + $0x70] sm:$0xff]
          %v344 = vld [vmem:[#allocation9 + $0x78] sm:$0xff]
          %345 = vmatprep.subr.mxu0 0.0
          %346 = vmatpush1.msra.mxu0 %v329
          %347 = vmatprep.subr.mxu0 0.0
          %348 = vmatpush1.msra.mxu0 %v330
          %349 = vmatprep.subr.mxu0 0.0
          %350 = vmatpush1.msra.mxu0 %v331
          %351 = vmatprep.subr.mxu0 0.0
          %352 = vmatpush1.msra.mxu0 %v332
          %353 = vmatprep.subr.mxu0 0.0
          %354 = vmatpush1.msra.mxu0 %v333
          %355 = vmatprep.subr.mxu0 0.0
          %356 = vmatpush1.msra.mxu0 %v334
          %357 = vmatprep.subr.mxu0 0.0
          %358 = vmatpush1.msra.mxu0 %v335
          %359 = vmatprep.subr.mxu0 0.0
          %360 = vmatpush1.msra.mxu0 %v336
          %361 = vmatprep.subr.mxu0 0.0
          %362 = vmatpush1.msra.mxu0 %v337
          %363 = vmatprep.subr.mxu0 0.0
          %364 = vmatpush1.msra.mxu0 %v338
          %365 = vmatprep.subr.mxu0 0.0
          %366 = vmatpush1.msra.mxu0 %v339
          %367 = vmatprep.subr.mxu0 0.0
          %368 = vmatpush1.msra.mxu0 %v340
          %369 = vmatprep.subr.mxu0 0.0
          %370 = vmatpush1.msra.mxu0 %v341
          %371 = vmatprep.subr.mxu0 0.0
          %372 = vmatpush1.msra.mxu0 %v342
          %373 = vmatprep.subr.mxu0 0.0
          %374 = vmatpush1.msra.mxu0 %v343
          %375 = vmatprep.subr.mxu0 0.0
          %376 = vmatpush1.msra.mxu0 %v344
          %377 = vmatprep.subr.mxu0 0.0
          %378 = vmatpush1.msra.mxu0 0.0
          %379 = vmatprep.subr.mxu0 0.0
          %380 = vmatpush1.msra.mxu0 0.0
          %381 = vmatprep.subr.mxu0 0.0
          %382 = vmatpush1.msra.mxu0 0.0
          %383 = vmatprep.subr.mxu0 0.0
          %384 = vmatpush1.msra.mxu0 0.0
          %385 = vmatprep.subr.mxu0 0.0
          %386 = vmatpush1.msra.mxu0 0.0
          %387 = vmatprep.subr.mxu0 0.0
          %388 = vmatpush1.msra.mxu0 0.0
          %389 = vmatprep.subr.mxu0 0.0
          %390 = vmatpush1.msra.mxu0 0.0
          %391 = vmatprep.subr.mxu0 0.0
          %392 = vmatpush1.msra.mxu0 0.0
          %393 = vmatprep.subr.mxu0 0.0
          %394 = vmatpush1.msra.mxu0 0.0
          %395 = vmatprep.subr.mxu0 0.0
          %396 = vmatpush1.msra.mxu0 0.0
          %397 = vmatprep.subr.mxu0 0.0
          %398 = vmatpush1.msra.mxu0 0.0
          %399 = vmatprep.subr.mxu0 0.0
          %400 = vmatpush1.msra.mxu0 0.0
          %401 = vmatprep.subr.mxu0 0.0
          %402 = vmatpush1.msra.mxu0 0.0
          %403 = vmatprep.subr.mxu0 0.0
          %404 = vmatpush1.msra.mxu0 0.0
          %405 = vmatprep.subr.mxu0 0.0
          %406 = vmatpush1.msra.mxu0 0.0
          %407 = vmatprep.subr.mxu0 0.0
          %408 = vmatpush1.msra.mxu0 0.0
          %409 = vmatprep.mubr.f32.mxu0 0.0
          %410 = vmatmul.mubr.f32.gmra.mrb[0].mxu0 %v321
          %v411 = vpop.f32.mrb[0].mxu0
          %v412 = vadd.f32 0.0, %v411
          %v413 = vpop.f32.mrb[0].mxu0
          %414 = vmatprep.mubr.f32.mxu0 0.0
          %415 = vmatmul.mubr.f32.gmra.mrb[0].mxu0 %v322
          %v416 = vpop.f32.mrb[0].mxu0
          %v417 = vadd.f32 0.0, %v416
          %v418 = vpop.f32.mrb[0].mxu0
          %419 = vmatprep.mubr.f32.mxu0 0.0
          %420 = vmatmul.mubr.f32.gmra.mrb[0].mxu0 %v323
          %v421 = vpop.f32.mrb[0].mxu0
          %v422 = vadd.f32 0.0, %v421
          %v423 = vpop.f32.mrb[0].mxu0
          %424 = vmatprep.mubr.f32.mxu0 0.0
          %425 = vmatmul.mubr.f32.gmra.mrb[0].mxu0 %v324
          %v426 = vpop.f32.mrb[0].mxu0
          %v427 = vadd.f32 0.0, %v426
          %v428 = vpop.f32.mrb[0].mxu0
          %429 = vmatprep.mubr.f32.mxu0 0.0
          %430 = vmatmul.mubr.f32.gmra.mrb[0].mxu0 %v325
          %v431 = vpop.f32.mrb[0].mxu0
          %v432 = vadd.f32 0.0, %v431
          %v433 = vpop.f32.mrb[0].mxu0
          %434 = vmatprep.mubr.f32.mxu0 0.0
          %435 = vmatmul.mubr.f32.gmra.mrb[0].mxu0 %v326
          %v436 = vpop.f32.mrb[0].mxu0
          %v437 = vadd.f32 0.0, %v436
          %v438 = vpop.f32.mrb[0].mxu0
          %439 = vmatprep.mubr.f32.mxu0 0.0
          %440 = vmatmul.mubr.f32.gmra.mrb[0].mxu0 %v327
          %v441 = vpop.f32.mrb[0].mxu0
          %v442 = vadd.f32 0.0, %v441
          %v443 = vpop.f32.mrb[0].mxu0
          %444 = vmatprep.mubr.f32.mxu0 0.0
          %445 = vmatmul.mubr.f32.gmra.mrb[0].mxu0 %v328
          %v446 = vpop.f32.mrb[0].mxu0
          %v447 = vadd.f32 0.0, %v446
          %v448 = vpop.f32.mrb[0].mxu0
          %449 = vdwg.mxu0
          %450 = vst [vmem:[#allocation2] sm:$0xff] %v412
          %451 = vst [vmem:[#allocation2 + $0x8] sm:$0xff] %v417
          %452 = vst [vmem:[#allocation2 + $0x10] sm:$0xff] %v422
          %453 = vst [vmem:[#allocation2 + $0x18] sm:$0xff] %v427
          %454 = vst [vmem:[#allocation2 + $0x20] sm:$0xff] %v432
          %455 = vst [vmem:[#allocation2 + $0x28] sm:$0xff] %v437
          %456 = vst [vmem:[#allocation2 + $0x30] sm:$0xff] %v442
          %457 = vst [vmem:[#allocation2 + $0x38] sm:$0xff] %v447
        $region64: #{tpu_custom_call.1} parent=43 // pred_fallthru
          _
        // Predicated region
        $region65: #{tpu_custom_call.1} parent=43 // pred_check
          %p458 = pneg %p315
        $region66: #{tpu_custom_call.1} parent=43 // pred_check_branch
          %460 = sbr.rel (%p458) target = $region68
        $region67: #{tpu_custom_call.1} parent=43 // pred_region
          %v461 = vld [vmem:[#allocation7] sm:$0xff]
          %v462 = vld [vmem:[#allocation7 + $0x8] sm:$0xff]
          %v463 = vld [vmem:[#allocation7 + $0x10] sm:$0xff]
          %v464 = vld [vmem:[#allocation7 + $0x18] sm:$0xff]
          %v465 = vld [vmem:[#allocation7 + $0x20] sm:$0xff]
          %v466 = vld [vmem:[#allocation7 + $0x28] sm:$0xff]
          %v467 = vld [vmem:[#allocation7 + $0x30] sm:$0xff]
          %v468 = vld [vmem:[#allocation7 + $0x38] sm:$0xff]
          %v469 = vld [vmem:[#allocation2] sm:$0xff]
          %v470 = vld [vmem:[#allocation2 + $0x8] sm:$0xff]
          %v471 = vld [vmem:[#allocation2 + $0x10] sm:$0xff]
          %v472 = vld [vmem:[#allocation2 + $0x18] sm:$0xff]
          %v473 = vld [vmem:[#allocation2 + $0x20] sm:$0xff]
          %v474 = vld [vmem:[#allocation2 + $0x28] sm:$0xff]
          %v475 = vld [vmem:[#allocation2 + $0x30] sm:$0xff]
          %v476 = vld [vmem:[#allocation2 + $0x38] sm:$0xff]
          %v477 = vld [vmem:[%s3] sm:$0x1]
          %v479 = vlaneseq
          %v480 = vshrl.u32 %v479, 7
          %v481 = vsub.s32 0, %v480
          %v482 = vrot.slane %v477, %v481
          %vm484 = vcmask 523264
          %v486 = vsel %vm484, %v461, 0
          %v489 = vsel %vm484, %v462, 0
          %v492 = vsel %vm484, %v463, 0
          %v495 = vsel %vm484, %v464, 0
          %v498 = vsel %vm484, %v465, 0
          %v501 = vsel %vm484, %v466, 0
          %v504 = vsel %vm484, %v467, 0
          %v507 = vsel %vm484, %v468, 0
          %509 = vmatprep.subr.mxu0 0.0
          %510 = vmatpush1.msra.mxu0 %v469
          %511 = vmatprep.subr.mxu0 0.0
          %512 = vmatpush1.msra.mxu0 %v470
          %513 = vmatprep.subr.mxu0 0.0
          %514 = vmatpush1.msra.mxu0 %v471
          %515 = vmatprep.subr.mxu0 0.0
          %516 = vmatpush1.msra.mxu0 %v472
          %517 = vmatprep.subr.mxu0 0.0
          %518 = vmatpush1.msra.mxu0 %v473
          %519 = vmatprep.subr.mxu0 0.0
          %520 = vmatpush1.msra.mxu0 %v474
          %521 = vmatprep.subr.mxu0 0.0
          %522 = vmatpush1.msra.mxu0 %v475
          %523 = vmatprep.subr.mxu0 0.0
          %524 = vmatpush1.msra.mxu0 %v476
          %525 = vmatprep.subr.mxu0 0.0
          %526 = vmatpush1.msra.mxu0 0.0
          %527 = vmatprep.subr.mxu0 0.0
          %528 = vmatpush1.msra.mxu0 0.0
          %529 = vmatprep.subr.mxu0 0.0
          %530 = vmatpush1.msra.mxu0 0.0
          %531 = vmatprep.subr.mxu0 0.0
          %532 = vmatpush1.msra.mxu0 0.0
          %533 = vmatprep.subr.mxu0 0.0
          %534 = vmatpush1.msra.mxu0 0.0
          %535 = vmatprep.subr.mxu0 0.0
          %536 = vmatpush1.msra.mxu0 0.0
          %537 = vmatprep.subr.mxu0 0.0
          %538 = vmatpush1.msra.mxu0 0.0
          %539 = vmatprep.subr.mxu0 0.0
          %540 = vmatpush1.msra.mxu0 0.0
          %541 = vmatprep.subr.mxu0 0.0
          %542 = vmatpush1.msra.mxu0 0.0
          %543 = vmatprep.subr.mxu0 0.0
          %544 = vmatpush1.msra.mxu0 0.0
          %545 = vmatprep.subr.mxu0 0.0
          %546 = vmatpush1.msra.mxu0 0.0
          %547 = vmatprep.subr.mxu0 0.0
          %548 = vmatpush1.msra.mxu0 0.0
          %549 = vmatprep.subr.mxu0 0.0
          %550 = vmatpush1.msra.mxu0 0.0
          %551 = vmatprep.subr.mxu0 0.0
          %552 = vmatpush1.msra.mxu0 0.0
          %553 = vmatprep.subr.mxu0 0.0
          %554 = vmatpush1.msra.mxu0 0.0
          %555 = vmatprep.subr.mxu0 0.0
          %556 = vmatpush1.msra.mxu0 0.0
          %557 = vmatprep.subr.mxu0 0.0
          %558 = vmatpush1.msra.mxu0 0.0
          %559 = vmatprep.subr.mxu0 0.0
          %560 = vmatpush1.msra.mxu0 0.0
          %561 = vmatprep.subr.mxu0 0.0
          %562 = vmatpush1.msra.mxu0 0.0
          %563 = vmatprep.subr.mxu0 0.0
          %564 = vmatpush1.msra.mxu0 0.0
          %565 = vmatprep.subr.mxu0 0.0
          %566 = vmatpush1.msra.mxu0 0.0
          %567 = vmatprep.subr.mxu0 0.0
          %568 = vmatpush1.msra.mxu0 0.0
          %569 = vmatprep.subr.mxu0 0.0
          %570 = vmatpush1.msra.mxu0 0.0
          %571 = vmatprep.subr.mxu0 0.0
          %572 = vmatpush1.msra.mxu0 0.0
          %573 = vmatprep.mubr.f32.mxu0 0.0
          %574 = vmatmul.mubr.f32.gmra.mrb[0].mxu0 %v486
          %v575 = vpop.f32.mrb[0].mxu0
          %v576 = vadd.f32 %v482, %v575
          %v577 = vpop.f32.mrb[0].mxu0
          %578 = vmatprep.mubr.f32.mxu0 0.0
          %579 = vmatmul.mubr.f32.gmra.mrb[0].mxu0 %v489
          %v580 = vpop.f32.mrb[0].mxu0
          %v581 = vadd.f32 %v482, %v580
          %v582 = vpop.f32.mrb[0].mxu0
          %583 = vmatprep.mubr.f32.mxu0 0.0
          %584 = vmatmul.mubr.f32.gmra.mrb[0].mxu0 %v492
          %v585 = vpop.f32.mrb[0].mxu0
          %v586 = vadd.f32 %v482, %v585
          %v587 = vpop.f32.mrb[0].mxu0
          %588 = vmatprep.mubr.f32.mxu0 0.0
          %589 = vmatmul.mubr.f32.gmra.mrb[0].mxu0 %v495
          %v590 = vpop.f32.mrb[0].mxu0
          %v591 = vadd.f32 %v482, %v590
          %v592 = vpop.f32.mrb[0].mxu0
          %593 = vmatprep.mubr.f32.mxu0 0.0
          %594 = vmatmul.mubr.f32.gmra.mrb[0].mxu0 %v498
          %v595 = vpop.f32.mrb[0].mxu0
          %v596 = vadd.f32 %v482, %v595
          %v597 = vpop.f32.mrb[0].mxu0
          %598 = vmatprep.mubr.f32.mxu0 0.0
          %599 = vmatmul.mubr.f32.gmra.mrb[0].mxu0 %v501
          %v600 = vpop.f32.mrb[0].mxu0
          %v601 = vadd.f32 %v482, %v600
          %v602 = vpop.f32.mrb[0].mxu0
          %603 = vmatprep.mubr.f32.mxu0 0.0
          %604 = vmatmul.mubr.f32.gmra.mrb[0].mxu0 %v504
          %v605 = vpop.f32.mrb[0].mxu0
          %v606 = vadd.f32 %v482, %v605
          %v607 = vpop.f32.mrb[0].mxu0
          %608 = vmatprep.mubr.f32.mxu0 0.0
          %609 = vmatmul.mubr.f32.gmra.mrb[0].mxu0 %v507
          %v610 = vpop.f32.mrb[0].mxu0
          %v611 = vadd.f32 %v482, %v610
          %v612 = vpop.f32.mrb[0].mxu0
          %613 = vdwg.mxu0
          %v614 = vmax.f32 %v576, 0.0
          %v615 = vmax.f32 %v581, 0.0
          %v616 = vmax.f32 %v586, 0.0
          %v617 = vmax.f32 %v591, 0.0
          %v618 = vmax.f32 %v596, 0.0
          %v619 = vmax.f32 %v601, 0.0
          %v620 = vmax.f32 %v606, 0.0
          %v621 = vmax.f32 %v611, 0.0
          %s622 = scalar_lea.vmem [#allocation3], %s314
          %623 = vst [vmem:[%s622] sm:$0xff] %v614
          %624 = vst [vmem:[%s622 + $0x8] sm:$0xff] %v615
          %625 = vst [vmem:[%s622 + $0x10] sm:$0xff] %v616
          %626 = vst [vmem:[%s622 + $0x18] sm:$0xff] %v617
          %627 = vst [vmem:[%s622 + $0x20] sm:$0xff] %v618
          %628 = vst [vmem:[%s622 + $0x28] sm:$0xff] %v619
          %629 = vst [vmem:[%s622 + $0x30] sm:$0xff] %v620
          %630 = vst [vmem:[%s622 + $0x38] sm:$0xff] %v621
        $region68: #{tpu_custom_call.1} parent=43 // pred_fallthru
          _
        %p631 = scmp.eq.s32.totalorder %s27, 1
        %p632 = pnand %p631, %p316
        %p633 = pneg %p632
        // Predicated region
        $region69: #{tpu_custom_call.1} parent=43 // pred_check
          _
        $region70: #{tpu_custom_call.1} parent=43 // pred_check_branch
          %635 = sbr.rel (%p632) target = $region72
        $region71: #{tpu_custom_call.1} parent=43 // pred_region
          %v636 = vld [vmem:[#allocation3] sm:$0xff]
          %v637 = vld [vmem:[#allocation3 + $0x8] sm:$0xff]
          %v638 = vld [vmem:[#allocation3 + $0x10] sm:$0xff]
          %v639 = vld [vmem:[#allocation3 + $0x18] sm:$0xff]
          %v640 = vld [vmem:[#allocation3 + $0x20] sm:$0xff]
          %v641 = vld [vmem:[#allocation3 + $0x28] sm:$0xff]
          %v642 = vld [vmem:[#allocation3 + $0x30] sm:$0xff]
          %v643 = vld [vmem:[#allocation3 + $0x38] sm:$0xff]
          %v644 = vld [vmem:[#allocation10] sm:$0xff]
          %v645 = vld [vmem:[#allocation10 + $0x8] sm:$0xff]
          %v646 = vld [vmem:[#allocation10 + $0x10] sm:$0xff]
          %v647 = vld [vmem:[#allocation10 + $0x18] sm:$0xff]
          %v648 = vld [vmem:[#allocation10 + $0x20] sm:$0xff]
          %v649 = vld [vmem:[#allocation10 + $0x28] sm:$0xff]
          %v650 = vld [vmem:[#allocation10 + $0x30] sm:$0xff]
          %v651 = vld [vmem:[#allocation10 + $0x38] sm:$0xff]
          %v652 = vld [vmem:[#allocation10 + $0x40] sm:$0xff]
          %v653 = vld [vmem:[#allocation10 + $0x48] sm:$0xff]
          %v654 = vld [vmem:[#allocation10 + $0x50] sm:$0xff]
          %v655 = vld [vmem:[#allocation10 + $0x58] sm:$0xff]
          %v656 = vld [vmem:[#allocation10 + $0x60] sm:$0xff]
          %v657 = vld [vmem:[#allocation10 + $0x68] sm:$0xff]
          %v658 = vld [vmem:[#allocation10 + $0x70] sm:$0xff]
          %v659 = vld [vmem:[#allocation10 + $0x78] sm:$0xff]
          %660 = vmatprep.subr.mxu0 0.0
          %661 = vmatpush1.msra.mxu0 %v644
          %662 = vmatprep.subr.mxu0 0.0
          %663 = vmatpush1.msra.mxu0 %v645
          %664 = vmatprep.subr.mxu0 0.0
          %665 = vmatpush1.msra.mxu0 %v646
          %666 = vmatprep.subr.mxu0 0.0
          %667 = vmatpush1.msra.mxu0 %v647
          %668 = vmatprep.subr.mxu0 0.0
          %669 = vmatpush1.msra.mxu0 %v648
          %670 = vmatprep.subr.mxu0 0.0
          %671 = vmatpush1.msra.mxu0 %v649
          %672 = vmatprep.subr.mxu0 0.0
          %673 = vmatpush1.msra.mxu0 %v650
          %674 = vmatprep.subr.mxu0 0.0
          %675 = vmatpush1.msra.mxu0 %v651
          %676 = vmatprep.subr.mxu0 0.0
          %677 = vmatpush1.msra.mxu0 %v652
          %678 = vmatprep.subr.mxu0 0.0
          %679 = vmatpush1.msra.mxu0 %v653
          %680 = vmatprep.subr.mxu0 0.0
          %681 = vmatpush1.msra.mxu0 %v654
          %682 = vmatprep.subr.mxu0 0.0
          %683 = vmatpush1.msra.mxu0 %v655
          %684 = vmatprep.subr.mxu0 0.0
          %685 = vmatpush1.msra.mxu0 %v656
          %686 = vmatprep.subr.mxu0 0.0
          %687 = vmatpush1.msra.mxu0 %v657
          %688 = vmatprep.subr.mxu0 0.0
          %689 = vmatpush1.msra.mxu0 %v658
          %690 = vmatprep.subr.mxu0 0.0
          %691 = vmatpush1.msra.mxu0 %v659
          %692 = vmatprep.subr.mxu0 0.0
          %693 = vmatpush1.msra.mxu0 0.0
          %694 = vmatprep.subr.mxu0 0.0
          %695 = vmatpush1.msra.mxu0 0.0
          %696 = vmatprep.subr.mxu0 0.0
          %697 = vmatpush1.msra.mxu0 0.0
          %698 = vmatprep.subr.mxu0 0.0
          %699 = vmatpush1.msra.mxu0 0.0
          %700 = vmatprep.subr.mxu0 0.0
          %701 = vmatpush1.msra.mxu0 0.0
          %702 = vmatprep.subr.mxu0 0.0
          %703 = vmatpush1.msra.mxu0 0.0
          %704 = vmatprep.subr.mxu0 0.0
          %705 = vmatpush1.msra.mxu0 0.0
          %706 = vmatprep.subr.mxu0 0.0
          %707 = vmatpush1.msra.mxu0 0.0
          %708 = vmatprep.subr.mxu0 0.0
          %709 = vmatpush1.msra.mxu0 0.0
          %710 = vmatprep.subr.mxu0 0.0
          %711 = vmatpush1.msra.mxu0 0.0
          %712 = vmatprep.subr.mxu0 0.0
          %713 = vmatpush1.msra.mxu0 0.0
          %714 = vmatprep.subr.mxu0 0.0
          %715 = vmatpush1.msra.mxu0 0.0
          %716 = vmatprep.subr.mxu0 0.0
          %717 = vmatpush1.msra.mxu0 0.0
          %718 = vmatprep.subr.mxu0 0.0
          %719 = vmatpush1.msra.mxu0 0.0
          %720 = vmatprep.subr.mxu0 0.0
          %721 = vmatpush1.msra.mxu0 0.0
          %722 = vmatprep.subr.mxu0 0.0
          %723 = vmatpush1.msra.mxu0 0.0
          %724 = vmatprep.mubr.f32.mxu0 0.0
          %725 = vmatmul.mubr.f32.gmra.mrb[0].mxu0 %v636
          %v726 = vpop.f32.mrb[0].mxu0
          %v727 = vadd.f32 0.0, %v726
          %v728 = vpop.f32.mrb[0].mxu0
          %729 = vmatprep.mubr.f32.mxu0 0.0
          %730 = vmatmul.mubr.f32.gmra.mrb[0].mxu0 %v637
          %v731 = vpop.f32.mrb[0].mxu0
          %v732 = vadd.f32 0.0, %v731
          %v733 = vpop.f32.mrb[0].mxu0
          %734 = vmatprep.mubr.f32.mxu0 0.0
          %735 = vmatmul.mubr.f32.gmra.mrb[0].mxu0 %v638
          %v736 = vpop.f32.mrb[0].mxu0
          %v737 = vadd.f32 0.0, %v736
          %v738 = vpop.f32.mrb[0].mxu0
          %739 = vmatprep.mubr.f32.mxu0 0.0
          %740 = vmatmul.mubr.f32.gmra.mrb[0].mxu0 %v639
          %v741 = vpop.f32.mrb[0].mxu0
          %v742 = vadd.f32 0.0, %v741
          %v743 = vpop.f32.mrb[0].mxu0
          %744 = vmatprep.mubr.f32.mxu0 0.0
          %745 = vmatmul.mubr.f32.gmra.mrb[0].mxu0 %v640
          %v746 = vpop.f32.mrb[0].mxu0
          %v747 = vadd.f32 0.0, %v746
          %v748 = vpop.f32.mrb[0].mxu0
          %749 = vmatprep.mubr.f32.mxu0 0.0
          %750 = vmatmul.mubr.f32.gmra.mrb[0].mxu0 %v641
          %v751 = vpop.f32.mrb[0].mxu0
          %v752 = vadd.f32 0.0, %v751
          %v753 = vpop.f32.mrb[0].mxu0
          %754 = vmatprep.mubr.f32.mxu0 0.0
          %755 = vmatmul.mubr.f32.gmra.mrb[0].mxu0 %v642
          %v756 = vpop.f32.mrb[0].mxu0
          %v757 = vadd.f32 0.0, %v756
          %v758 = vpop.f32.mrb[0].mxu0
          %759 = vmatprep.mubr.f32.mxu0 0.0
          %760 = vmatmul.mubr.f32.gmra.mrb[0].mxu0 %v643
          %v761 = vpop.f32.mrb[0].mxu0
          %v762 = vadd.f32 0.0, %v761
          %v763 = vpop.f32.mrb[0].mxu0
          %764 = vdwg.mxu0
          %765 = vst [vmem:[#allocation2] sm:$0xff] %v727
          %766 = vst [vmem:[#allocation2 + $0x8] sm:$0xff] %v732
          %767 = vst [vmem:[#allocation2 + $0x10] sm:$0xff] %v737
          %768 = vst [vmem:[#allocation2 + $0x18] sm:$0xff] %v742
          %769 = vst [vmem:[#allocation2 + $0x20] sm:$0xff] %v747
          %770 = vst [vmem:[#allocation2 + $0x28] sm:$0xff] %v752
          %771 = vst [vmem:[#allocation2 + $0x30] sm:$0xff] %v757
          %772 = vst [vmem:[#allocation2 + $0x38] sm:$0xff] %v762
        $region72: #{tpu_custom_call.1} parent=43 // pred_fallthru
          _
        // Predicated region
        $region73: #{tpu_custom_call.1} parent=43 // pred_check
          %p773 = pneg %p631
        $region74: #{tpu_custom_call.1} parent=43 // pred_check_branch
          %775 = sbr.rel (%p773) target = $region76
        $region75: #{tpu_custom_call.1} parent=43 // pred_region
          %v776 = vld [vmem:[#allocation7] sm:$0xff]
          %v777 = vld [vmem:[#allocation7 + $0x8] sm:$0xff]
          %v778 = vld [vmem:[#allocation7 + $0x10] sm:$0xff]
          %v779 = vld [vmem:[#allocation7 + $0x18] sm:$0xff]
          %v780 = vld [vmem:[#allocation7 + $0x20] sm:$0xff]
          %v781 = vld [vmem:[#allocation7 + $0x28] sm:$0xff]
          %v782 = vld [vmem:[#allocation7 + $0x30] sm:$0xff]
          %v783 = vld [vmem:[#allocation7 + $0x38] sm:$0xff]
          %v784 = vld [vmem:[#allocation2] sm:$0xff]
          %v785 = vld [vmem:[#allocation2 + $0x8] sm:$0xff]
          %v786 = vld [vmem:[#allocation2 + $0x10] sm:$0xff]
          %v787 = vld [vmem:[#allocation2 + $0x18] sm:$0xff]
          %v788 = vld [vmem:[#allocation2 + $0x20] sm:$0xff]
          %v789 = vld [vmem:[#allocation2 + $0x28] sm:$0xff]
          %v790 = vld [vmem:[#allocation2 + $0x30] sm:$0xff]
          %v791 = vld [vmem:[#allocation2 + $0x38] sm:$0xff]
          %v792 = vld [vmem:[%s5] sm:$0x1]
          %v794 = vlaneseq
          %v795 = vshrl.u32 %v794, 7
          %v796 = vsub.s32 0, %v795
          %v797 = vrot.slane %v792, %v796
          %vm799 = vcmask 523264
          %v801 = vsel %vm799, %v776, 0
          %v804 = vsel %vm799, %v777, 0
          %v807 = vsel %vm799, %v778, 0
          %v810 = vsel %vm799, %v779, 0
          %v813 = vsel %vm799, %v780, 0
          %v816 = vsel %vm799, %v781, 0
          %v819 = vsel %vm799, %v782, 0
          %v822 = vsel %vm799, %v783, 0
          %824 = vmatprep.subr.mxu0 0.0
          %825 = vmatpush1.msra.mxu0 %v784
          %826 = vmatprep.subr.mxu0 0.0
          %827 = vmatpush1.msra.mxu0 %v785
          %828 = vmatprep.subr.mxu0 0.0
          %829 = vmatpush1.msra.mxu0 %v786
          %830 = vmatprep.subr.mxu0 0.0
          %831 = vmatpush1.msra.mxu0 %v787
          %832 = vmatprep.subr.mxu0 0.0
          %833 = vmatpush1.msra.mxu0 %v788
          %834 = vmatprep.subr.mxu0 0.0
          %835 = vmatpush1.msra.mxu0 %v789
          %836 = vmatprep.subr.mxu0 0.0
          %837 = vmatpush1.msra.mxu0 %v790
          %838 = vmatprep.subr.mxu0 0.0
          %839 = vmatpush1.msra.mxu0 %v791
          %840 = vmatprep.subr.mxu0 0.0
          %841 = vmatpush1.msra.mxu0 0.0
          %842 = vmatprep.subr.mxu0 0.0
          %843 = vmatpush1.msra.mxu0 0.0
          %844 = vmatprep.subr.mxu0 0.0
          %845 = vmatpush1.msra.mxu0 0.0
          %846 = vmatprep.subr.mxu0 0.0
          %847 = vmatpush1.msra.mxu0 0.0
          %848 = vmatprep.subr.mxu0 0.0
          %849 = vmatpush1.msra.mxu0 0.0
          %850 = vmatprep.subr.mxu0 0.0
          %851 = vmatpush1.msra.mxu0 0.0
          %852 = vmatprep.subr.mxu0 0.0
          %853 = vmatpush1.msra.mxu0 0.0
          %854 = vmatprep.subr.mxu0 0.0
          %855 = vmatpush1.msra.mxu0 0.0
          %856 = vmatprep.subr.mxu0 0.0
          %857 = vmatpush1.msra.mxu0 0.0
          %858 = vmatprep.subr.mxu0 0.0
          %859 = vmatpush1.msra.mxu0 0.0
          %860 = vmatprep.subr.mxu0 0.0
          %861 = vmatpush1.msra.mxu0 0.0
          %862 = vmatprep.subr.mxu0 0.0
          %863 = vmatpush1.msra.mxu0 0.0
          %864 = vmatprep.subr.mxu0 0.0
          %865 = vmatpush1.msra.mxu0 0.0
          %866 = vmatprep.subr.mxu0 0.0
          %867 = vmatpush1.msra.mxu0 0.0
          %868 = vmatprep.subr.mxu0 0.0
          %869 = vmatpush1.msra.mxu0 0.0
          %870 = vmatprep.subr.mxu0 0.0
          %871 = vmatpush1.msra.mxu0 0.0
          %872 = vmatprep.subr.mxu0 0.0
          %873 = vmatpush1.msra.mxu0 0.0
          %874 = vmatprep.subr.mxu0 0.0
          %875 = vmatpush1.msra.mxu0 0.0
          %876 = vmatprep.subr.mxu0 0.0
          %877 = vmatpush1.msra.mxu0 0.0
          %878 = vmatprep.subr.mxu0 0.0
          %879 = vmatpush1.msra.mxu0 0.0
          %880 = vmatprep.subr.mxu0 0.0
          %881 = vmatpush1.msra.mxu0 0.0
          %882 = vmatprep.subr.mxu0 0.0
          %883 = vmatpush1.msra.mxu0 0.0
          %884 = vmatprep.subr.mxu0 0.0
          %885 = vmatpush1.msra.mxu0 0.0
          %886 = vmatprep.subr.mxu0 0.0
          %887 = vmatpush1.msra.mxu0 0.0
          %888 = vmatprep.mubr.f32.mxu0 0.0
          %889 = vmatmul.mubr.f32.gmra.mrb[0].mxu0 %v801
          %v890 = vpop.f32.mrb[0].mxu0
          %v891 = vadd.f32 %v797, %v890
          %v892 = vpop.f32.mrb[0].mxu0
          %893 = vmatprep.mubr.f32.mxu0 0.0
          %894 = vmatmul.mubr.f32.gmra.mrb[0].mxu0 %v804
          %v895 = vpop.f32.mrb[0].mxu0
          %v896 = vadd.f32 %v797, %v895
          %v897 = vpop.f32.mrb[0].mxu0
          %898 = vmatprep.mubr.f32.mxu0 0.0
          %899 = vmatmul.mubr.f32.gmra.mrb[0].mxu0 %v807
          %v900 = vpop.f32.mrb[0].mxu0
          %v901 = vadd.f32 %v797, %v900
          %v902 = vpop.f32.mrb[0].mxu0
          %903 = vmatprep.mubr.f32.mxu0 0.0
          %904 = vmatmul.mubr.f32.gmra.mrb[0].mxu0 %v810
          %v905 = vpop.f32.mrb[0].mxu0
          %v906 = vadd.f32 %v797, %v905
          %v907 = vpop.f32.mrb[0].mxu0
          %908 = vmatprep.mubr.f32.mxu0 0.0
          %909 = vmatmul.mubr.f32.gmra.mrb[0].mxu0 %v813
          %v910 = vpop.f32.mrb[0].mxu0
          %v911 = vadd.f32 %v797, %v910
          %v912 = vpop.f32.mrb[0].mxu0
          %913 = vmatprep.mubr.f32.mxu0 0.0
          %914 = vmatmul.mubr.f32.gmra.mrb[0].mxu0 %v816
          %v915 = vpop.f32.mrb[0].mxu0
          %v916 = vadd.f32 %v797, %v915
          %v917 = vpop.f32.mrb[0].mxu0
          %918 = vmatprep.mubr.f32.mxu0 0.0
          %919 = vmatmul.mubr.f32.gmra.mrb[0].mxu0 %v819
          %v920 = vpop.f32.mrb[0].mxu0
          %v921 = vadd.f32 %v797, %v920
          %v922 = vpop.f32.mrb[0].mxu0
          %923 = vmatprep.mubr.f32.mxu0 0.0
          %924 = vmatmul.mubr.f32.gmra.mrb[0].mxu0 %v822
          %v925 = vpop.f32.mrb[0].mxu0
          %v926 = vadd.f32 %v797, %v925
          %v927 = vpop.f32.mrb[0].mxu0
          %928 = vdwg.mxu0
          %929 = vst [vmem:[%s310] sm:$0xff] %v891
          %930 = vst [vmem:[%s310 + $0x8] sm:$0xff] %v896
          %931 = vst [vmem:[%s310 + $0x10] sm:$0xff] %v901
          %932 = vst [vmem:[%s310 + $0x18] sm:$0xff] %v906
          %933 = vst [vmem:[%s310 + $0x20] sm:$0xff] %v911
          %934 = vst [vmem:[%s310 + $0x28] sm:$0xff] %v916
          %935 = vst [vmem:[%s310 + $0x30] sm:$0xff] %v921
          %936 = vst [vmem:[%s310 + $0x38] sm:$0xff] %v926
        $region76: #{tpu_custom_call.1} parent=43 // pred_fallthru
          _
        %s937 = sand.u32 %s176, 1
        %s938 = scalar_lea.sflag [#allocation6], %s937
        %s939 = sand.u32 %s176, 1
        %s940 = smul.addr %s939, 64
        %s941 = scalar_lea.vmem [#allocation12], %s940
        // Predicated region
        $region77: #{tpu_custom_call.1} parent=43 // pred_check
          %p942 = pneg %p186
        $region78: #{tpu_custom_call.1} parent=43 // pred_check_branch
          %944 = sbr.rel (%p942) target = $region80
        $region79: #{tpu_custom_call.1} parent=43 // pred_region
          %s945 = smul.u32 %s27, %s28
          %s946 = smul.u32 8, %s945
          %s948 = ssub.s32 1024, 1024
          %949 = vsyncadd %s938, %s948
          %s950 = smul.addr %s946, 128
          %s951 = scalar_lea.hbm %s6, %s950
          %s952 = sshll.u32 %s941, 4
          %s953 = int_to_ptr.vmem [resolvable:$true] %s952
          %958 = dma.vmem_to_hbm [thread:$0]  %s953, 1024, %s951, %s938, 128, 128, 8
        $region80: #{tpu_custom_call.1} parent=43 // pred_fallthru
          _
      $region44: #{tpu_custom_call.1} parent=5 // pred_fallthru
        _
      %p959 = scmp.le.s32.totalorder 2, %s18
      // Predicated region
      $region81: #{tpu_custom_call.1} parent=5 // pred_check
        %p960 = pneg %p959
      $region82: #{tpu_custom_call.1} parent=5 // pred_check_branch
        %962 = sbr.rel (%p960) target = $region84
      $region83: #{tpu_custom_call.1} parent=5 // pred_region
        %s963 = ssub.s32 %s18, 2
        // Predicated region
        $region85: #{tpu_custom_call.1} parent=83 // pred_check
          %p964 = pneg %p192
        $region86: #{tpu_custom_call.1} parent=83 // pred_check_branch
          %966 = sbr.rel (%p964) target = $region88
        $region87: #{tpu_custom_call.1} parent=83 // pred_region
          %s967 = sand.u32 %s177, 1
          %s968 = scalar_lea.sflag [#allocation6], %s967
          %s969 = sand.u32 %s177, 1
          %s970 = smul.addr %s969, 64
          %s971 = scalar_lea.vmem [#allocation12], %s970
          %972 = dma.done %s968, 1024
        $region88: #{tpu_custom_call.1} parent=83 // pred_fallthru
          _
      $region84: #{tpu_custom_call.1} parent=5 // pred_fallthru
        _
    $region6: #{tpu_custom_call.1} parent=1 // loop_footer
      %s22 = sadd.s32 1, %s18
    $region7: #{tpu_custom_call.1} parent=1 // loop_footer_branch
      %17 = sbr.rel target = $region3
    $region8: #{tpu_custom_call.1} parent=1 // loop_exit
      _
    %973 = vsyncpa [#allocation5], 1
    %s974 = scalar_lea.sflag [#allocation5], 1
    %975 = vsyncpa %s974, 1
    %976 = vsyncpa [#allocation8], 1
    %977 = vsyncpa [#allocation11], 1
    %978 = vsyncpa [#allocation6], 1
    %s979 = scalar_lea.sflag [#allocation6], 1
    %980 = vsyncpa %s979, 1

</llo_original>
